<compile_context>
chip_gen: v5e
topology: v5e:2x2
jax: 0.10.0
libtpu: 0.0.40
codegen_flags: <defaults>
</compile_context>

<pallas_src>
import jax
import jax.numpy as jnp
from jax.experimental import pallas as pl
from jax.experimental.pallas import tpu as pltpu


def mlp_kernel(x_ref, w1t_ref, b1_ref, w2t_ref, b2_ref, o_ref):
    # x_ref: (D, TB) f32 block.  Cast to bf16 here so x is streamed from HBM
    # exactly once, in its original dtype (review item #2).
    xb = x_ref[...].astype(jnp.bfloat16)

    # Hidden layer, batch-in-lanes: h^T = W1^T @ x^T -> (H, TB), f32 accumulate.
    ht = jnp.dot(w1t_ref[...], xb, preferred_element_type=jnp.float32)
    # Bias (H, 1) broadcasts across the lane (batch) dim; ReLU in f32.
    ht = jnp.maximum(ht + b1_ref[...], 0.0)

    # Output layer: o^T = W2^T @ h^T -> (C, TB); h rounded to bf16 for the MXU.
    ot = jnp.dot(w2t_ref[...], ht.astype(jnp.bfloat16),
                 preferred_element_type=jnp.float32)
    # Lane-dense store: last dim is TB (multiple of 128), no vst.msk lane masking.
    o_ref[...] = (ot + b2_ref[...]).astype(o_ref.dtype)


def simple_net_forward(x, w1, b1, w2, b2, *, block_batch=32768):
    """x: [B, input_dim] f32; w1: [in, hidden]; b1: [1, hidden]; w2: [hidden, C]; b2: [1, C].

    Returns [B, C] in x.dtype.  Math: relu(x @ w1 + b1) @ w2 + b2 with
    bf16 MXU inputs and f32 accumulation/epilogue.
    """
    B, D = x.shape
    H = w1.shape[1]
    C = w2.shape[1]
    out_dtype = x.dtype

    # --- layout plumbing (boundary transposes; see header note) ---
    xt = x.T                                          # (D, B), stays f32 (cast in-kernel)
    w1t = w1.T.astype(jnp.bfloat16)                   # (H, D)  tiny, one-time
    w2t = w2.T.astype(jnp.bfloat16)                   # (C, H)  tiny, one-time
    b1c = jnp.reshape(b1, (H, 1)).astype(jnp.float32)
    b2c = jnp.reshape(b2, (C, 1)).astype(jnp.float32)

    # Batch tile = lane dimension.  Multiple of 128 for dense lanes; if the
    # whole batch fits in one tile the block equals the full array dim (legal).
    # No host padding: a ragged last block (B % TB != 0) is masked by Pallas.
    assert block_batch % 128 == 0, "block_batch must be a multiple of 128"
    TB = B if B <= block_batch else block_batch
    grid = (pl.cdiv(B, TB),)

    out_t = pl.pallas_call(
        mlp_kernel,
        out_shape=jax.ShapeDtypeStruct((C, B), out_dtype),
        grid=grid,
        in_specs=[
            # x^T streams over the batch (lane) grid axis.
            pl.BlockSpec((D, TB), lambda i: (0, i)),
            # Parameters: full-array blocks, constant index_maps -> fetched once.
            pl.BlockSpec((H, D), lambda i: (0, 0)),
            pl.BlockSpec((H, 1), lambda i: (0, 0)),
            pl.BlockSpec((C, H), lambda i: (0, 0)),
            pl.BlockSpec((C, 1), lambda i: (0, 0)),
        ],
        # Lane-dense output: last dim is TB, not num_classes.
        out_specs=pl.BlockSpec((C, TB), lambda i: (0, i)),
        compiler_params=pltpu.CompilerParams(
            # Batch tiles are independent -> shard grid steps across v7x's two
            # TensorCores; harmless no-op on single-TC v5e/v6e.  (For huge B on
            # v7x, pick block_batch so the grid has >= 4 steps.)
            dimension_semantics=("parallel",)),
    )(xt, w1t, b1c, w2t, b2c)

    return out_t.T  # (B, C)


def init_params(key, input_dim=10, hidden_dim=16, num_classes=2):
    # Deterministic init mimicking nn.Linear's default U(-1/sqrt(fan_in), +1/sqrt(fan_in)).
    k1, k2, k3, k4 = jax.random.split(key, 4)
    bound1 = 1.0 / jnp.sqrt(input_dim)
    bound2 = 1.0 / jnp.sqrt(hidden_dim)
    w1 = jax.random.uniform(k1, (input_dim, hidden_dim), jnp.float32, -bound1, bound1)
    b1 = jax.random.uniform(k2, (1, hidden_dim), jnp.float32, -bound1, bound1)
    w2 = jax.random.uniform(k3, (hidden_dim, num_classes), jnp.float32, -bound2, bound2)
    b2 = jax.random.uniform(k4, (1, num_classes), jnp.float32, -bound2, bound2)
    return w1, b1, w2, b2


if __name__ == "__main__":
    key = jax.random.PRNGKey(0)
    kx, kp = jax.random.split(key)

    batch, input_dim, hidden_dim, num_classes = 8, 10, 16, 2
    x = jax.random.normal(kx, (batch, input_dim), jnp.float32)
    w1, b1, w2, b2 = init_params(kp, input_dim, hidden_dim, num_classes)

    out = simple_net_forward(x, w1, b1, w2, b2)
    out = jax.block_until_ready(out)

    # Plain-JAX reference that reproduces the kernel's rounding exactly:
    # x/w1/w2 rounded to bf16, f32 math, and h rounded to bf16 before the
    # second matmul (matches h.astype(bf16) in the kernel — review note).
    xr = x.astype(jnp.bfloat16).astype(jnp.float32)
    w1r = w1.astype(jnp.bfloat16).astype(jnp.float32)
    w2r = w2.astype(jnp.bfloat16).astype(jnp.float32)
    h = jnp.maximum(xr @ w1r + b1, 0.0)
    h = h.astype(jnp.bfloat16).astype(jnp.float32)
    ref = h @ w2r + b2

    assert out.shape == (batch, num_classes)
    assert out.dtype == x.dtype
    assert jnp.allclose(out, ref, atol=1e-3, rtol=1e-3)

    print("KERNEL_OK")
</pallas_src>

<mosaic_0001>
module attributes {stable_mosaic.version = 11 : i64} {
  func.func @mlp_kernel(%arg0: i32, %arg1: memref<10x8xf32, #tpu.memory_space<vmem>>, %arg2: memref<16x10xbf16, #tpu.memory_space<vmem>>, %arg3: memref<16x1xf32, #tpu.memory_space<vmem>>, %arg4: memref<2x16xbf16, #tpu.memory_space<vmem>>, %arg5: memref<2x1xf32, #tpu.memory_space<vmem>>, %arg6: memref<2x8xf32, #tpu.memory_space<vmem>>) attributes {dimension_semantics = [#tpu.dimension_semantics<parallel>], iteration_bounds = array<i64: 1>, scalar_prefetch = 0 : i64, scratch_operands = 0 : i64, tpu.core_type = #tpu.core_type<tc>, window_params = [{transform_indices = @transform_0, window_bounds = array<i64: 10, 8>}, {pipeline_mode = #tpu.pipeline_mode<synchronous>, transform_indices = @transform_1, window_bounds = array<i64: 16, 10>}, {pipeline_mode = #tpu.pipeline_mode<synchronous>, transform_indices = @transform_2, window_bounds = array<i64: 16, 1>}, {pipeline_mode = #tpu.pipeline_mode<synchronous>, transform_indices = @transform_3, window_bounds = array<i64: 2, 16>}, {pipeline_mode = #tpu.pipeline_mode<synchronous>, transform_indices = @transform_4, window_bounds = array<i64: 2, 1>}, {transform_indices = @transform_5, window_bounds = array<i64: 2, 8>}]} {
    %c0 = arith.constant 0 : index
    %c0_0 = arith.constant 0 : index
    %0 = vector.load %arg1[%c0, %c0_0] : memref<10x8xf32, #tpu.memory_space<vmem>>, vector<10x8xf32>
    %1 = arith.truncf %0 : vector<10x8xf32> to vector<10x8xbf16>
    %c0_1 = arith.constant 0 : index
    %c0_2 = arith.constant 0 : index
    %2 = vector.load %arg2[%c0_1, %c0_2] : memref<16x10xbf16, #tpu.memory_space<vmem>>, vector<16x10xbf16>
    %cst = arith.constant dense<0.000000e+00> : vector<16x8xf32>
    %3 = tpu.matmul %2, %1, %cst {dimension_numbers = #tpu.dot_dimension_numbers<[1], [0], [0], [1], [0, 0, 1, 1], [], []>} : vector<16x10xbf16>, vector<10x8xbf16>, vector<16x8xf32> -> vector<16x8xf32>
    %c0_3 = arith.constant 0 : index
    %c0_4 = arith.constant 0 : index
    %4 = vector.load %arg3[%c0_3, %c0_4] : memref<16x1xf32, #tpu.memory_space<vmem>>, vector<16x1xf32>
    %5 = vector.broadcast %4 : vector<16x1xf32> to vector<16x8xf32>
    %6 = arith.addf %3, %5 : vector<16x8xf32>
    %cst_5 = arith.constant 0.000000e+00 : f32
    %7 = vector.broadcast %cst_5 : f32 to vector<16x8xf32>
    %8 = arith.maximumf %6, %7 : vector<16x8xf32>
    %c0_6 = arith.constant 0 : index
    %c0_7 = arith.constant 0 : index
    %9 = vector.load %arg4[%c0_6, %c0_7] : memref<2x16xbf16, #tpu.memory_space<vmem>>, vector<2x16xbf16>
    %10 = arith.truncf %8 : vector<16x8xf32> to vector<16x8xbf16>
    %cst_8 = arith.constant dense<0.000000e+00> : vector<2x8xf32>
    %11 = tpu.matmul %9, %10, %cst_8 {dimension_numbers = #tpu.dot_dimension_numbers<[1], [0], [0], [1], [0, 0, 1, 1], [], []>} : vector<2x16xbf16>, vector<16x8xbf16>, vector<2x8xf32> -> vector<2x8xf32>
    %c0_9 = arith.constant 0 : index
    %c0_10 = arith.constant 0 : index
    %12 = vector.load %arg5[%c0_9, %c0_10] : memref<2x1xf32, #tpu.memory_space<vmem>>, vector<2x1xf32>
    %13 = vector.broadcast %12 : vector<2x1xf32> to vector<2x8xf32>
    %14 = arith.addf %11, %13 : vector<2x8xf32>
    %c0_11 = arith.constant 0 : index
    %c0_12 = arith.constant 0 : index
    %15 = vector.load %arg6[%c0_11, %c0_12] : memref<2x8xf32, #tpu.memory_space<vmem>>, vector<2x8xf32>
    tpu.vector_store %arg6[%c0_11, %c0_12], %14 {strides = array<i32>} : memref<2x8xf32, #tpu.memory_space<vmem>>, vector<2x8xf32>,
    return
  }
  func.func @transform_0(%arg0: i32) -> (i32, i32) {
    %c0_i32 = arith.constant 0 : i32
    %c0_i32_0 = arith.constant 0 : i32
    return %c0_i32, %arg0 : i32, i32
  }
  func.func @transform_1(%arg0: i32) -> (i32, i32) {
    %c0_i32 = arith.constant 0 : i32
    %c0_i32_0 = arith.constant 0 : i32
    %c0_i32_1 = arith.constant 0 : i32
    return %c0_i32, %c0_i32_0 : i32, i32
  }
  func.func @transform_2(%arg0: i32) -> (i32, i32) {
    %c0_i32 = arith.constant 0 : i32
    %c0_i32_0 = arith.constant 0 : i32
    %c0_i32_1 = arith.constant 0 : i32
    return %c0_i32, %c0_i32_0 : i32, i32
  }
  func.func @transform_3(%arg0: i32) -> (i32, i32) {
    %c0_i32 = arith.constant 0 : i32
    %c0_i32_0 = arith.constant 0 : i32
    %c0_i32_1 = arith.constant 0 : i32
    return %c0_i32, %c0_i32_0 : i32, i32
  }
  func.func @transform_4(%arg0: i32) -> (i32, i32) {
    %c0_i32 = arith.constant 0 : i32
    %c0_i32_0 = arith.constant 0 : i32
    %c0_i32_1 = arith.constant 0 : i32
    return %c0_i32, %c0_i32_0 : i32, i32
  }
  func.func @transform_5(%arg0: i32) -> (i32, i32) {
    %c0_i32 = arith.constant 0 : i32
    %c0_i32_0 = arith.constant 0 : i32
    return %c0_i32, %arg0 : i32, i32
  }
}

</mosaic_0001>

<llo_original>
// kernel: tpu_custom_call.1
$region0: #{tpu_custom_call.1}
  #allocation0 [shape = 'u32[]', space=smem, size = 0x4, offset = 0x4, fixed_abs, tag = 'smem constant byte address 0x4 - core index']
  #allocation1 [shape = 'u32[72,128]{1,0:T(1,128)}', space=vmem, size = 0x9000, scoped, tag = 'internal scratch']
  %s0 = inlined_call_operand.vmem [shape: f32[10,8], index: 0, kind: input, shape index: {}]
  %s1 = inlined_call_operand.vmem [shape: bf16[16,10], index: 1, kind: input, shape index: {}]
  %s2 = inlined_call_operand.vmem [shape: f32[16,1], index: 2, kind: input, shape index: {}]
  %s3 = inlined_call_operand.vmem [shape: bf16[2,16], index: 3, kind: input, shape index: {}]
  %s4 = inlined_call_operand.vmem [shape: f32[2,1], index: 4, kind: input, shape index: {}]
  %s5 = inlined_call_operand.hbm [shape: f32[2,8], index: 5, kind: output, shape index: {}]
  %s6 = sld [smem:[#allocation0]]
  $region30: #{tpu_custom_call.1} parent=0
    _
  %s8 = ssub.s32 1, %s6
  %s9 = scalar_select 0, %s8, %s6
  $region1: #{tpu_custom_call.1} parent=0
    #allocation2 [shape = 'u8[1024]{0}', space=vmem, size = 0x400, scoped, tag = 'output window, operand 0, single buffered']
    #allocation3 [shape = 's32[1]{0}', space=sflag, size = 0x4, scoped, tag = 'scoped memory for tpu_custom_call.1']
    %10 = vsyncpa [#allocation3], 0
    // Predicated region
    $region2: #{tpu_custom_call.1} parent=1 // pred_check
      _
    $region3: #{tpu_custom_call.1} parent=1 // pred_check_branch
      %12 = sbr.rel (0) target = $region5
    $region4: #{tpu_custom_call.1} parent=1 // pred_region
      _
    $region5: #{tpu_custom_call.1} parent=1 // pred_fallthru
      _
    // Predicated region
    $region6: #{tpu_custom_call.1} parent=1 // pred_check
      _
    $region7: #{tpu_custom_call.1} parent=1 // pred_check_branch
      %14 = sbr.rel (0) target = $region9
    $region8: #{tpu_custom_call.1} parent=1 // pred_region
      _
    $region9: #{tpu_custom_call.1} parent=1 // pred_fallthru
      _
    // Predicated region
    $region10: #{tpu_custom_call.1} parent=1 // pred_check
      _
    $region11: #{tpu_custom_call.1} parent=1 // pred_check_branch
      %16 = sbr.rel (0) target = $region13
    $region12: #{tpu_custom_call.1} parent=1 // pred_region
      _
    $region13: #{tpu_custom_call.1} parent=1 // pred_fallthru
      _
    // Predicated region
    $region14: #{tpu_custom_call.1} parent=1 // pred_check
      _
    $region15: #{tpu_custom_call.1} parent=1 // pred_check_branch
      %18 = sbr.rel (0) target = $region17
    $region16: #{tpu_custom_call.1} parent=1 // pred_region
      _
    $region17: #{tpu_custom_call.1} parent=1 // pred_fallthru
      _
    // Predicated region
    $region18: #{tpu_custom_call.1} parent=1 // pred_check
      _
    $region19: #{tpu_custom_call.1} parent=1 // pred_check_branch
      %20 = sbr.rel (0) target = $region21
    $region20: #{tpu_custom_call.1} parent=1 // pred_region
      _
    $region21: #{tpu_custom_call.1} parent=1 // pred_fallthru
      _
    %v22 = vld [vmem:[%s0] sm:$0xff]
    %v23 = vld [vmem:[%s0 + $0x8] sm:$0x3]
    %v24 = vpack.c.bf16 %v23, %v22
    %v25 = vld [vmem:[%s1] sm:$0xf]
    %v26 = vld [vmem:[%s1 + $0x4] sm:$0xf]
    %v27 = vld [vmem:[%s2] sm:$0xff]
    %v28 = vld [vmem:[%s2 + $0x8] sm:$0xff]
    %30 = vset.pattern.permute.xlu0 0
    %31 = vperm.xlu0 %30, %v27
    %v32 = vpop.permute.xlu0 %31
    %35 = vset.pattern.permute.xlu0 0
    %36 = vperm.xlu0 %35, %v28
    %v37 = vpop.permute.xlu0 %36
    %v41 = vunpack.c.l.b16 %v25
    %v42 = vunpack.c.l.b16 %v26
    %v43 = vpack.c.b16 %v42, %v41
    %vm44 = vcmask 80896
    %v46 = vsel %vm44, %v43, 0
    %vm48 = vcmask 1044480
    %v50 = vsel %vm48, %v24, 0
    %52 = vmatpush.bf16.msra.mxu0 0
    %53 = vmatpush.bf16.msra.mxu0 0
    %54 = vmatpush.bf16.msra.mxu0 0
    %55 = vmatpush.bf16.msra.mxu0 0
    %56 = vmatpush.bf16.msra.mxu0 0
    %57 = vmatpush.bf16.msra.mxu0 0
    %58 = vmatpush.bf16.msra.mxu0 0
    %59 = vmatpush.bf16.msra.mxu0 %v50
    %60 = vmatmul.bf16.gmra.mxu0 %v46
    %v61 = vpop.f32.mrf.mxu0
    %v62 = vadd.f32 %v32, %v61
    %v63 = vpop.f32.mrf.mxu0
    %v64 = vadd.f32 %v37, %v63
    %65 = vdwg.mxu0
    %v66 = vmax.f32 %v62, 0.0
    %v67 = vmax.f32 %v64, 0.0
    %v68 = vld [vmem:[%s3] sm:$0x1]
    %v69 = vpack.c.bf16 %v67, %v66
    %v70 = vld [vmem:[%s4] sm:$0x3]
    %72 = vset.pattern.permute.xlu0 0
    %73 = vperm.xlu0 %72, %v70
    %v74 = vpop.permute.xlu0 %73
    %vm76 = vcmask 130048
    %v78 = vsel %vm76, %v68, 0
    %80 = vmatpush.bf16.msra.mxu0 0
    %81 = vmatpush.bf16.msra.mxu0 0
    %82 = vmatpush.bf16.msra.mxu0 0
    %83 = vmatpush.bf16.msra.mxu0 0
    %84 = vmatpush.bf16.msra.mxu0 0
    %85 = vmatpush.bf16.msra.mxu0 0
    %86 = vmatpush.bf16.msra.mxu0 0
    %87 = vmatpush.bf16.msra.mxu0 %v69
    %88 = vmatmul.bf16.gmra.mxu0 %v78
    %v89 = vpop.f32.mrf.mxu0
    %v90 = vadd.f32 %v74, %v89
    %v91 = vpop.f32.mrf.mxu0
    %92 = vdwg.mxu0
    %vm93 = vcmask 58368
    %94 = vst.msk [vmem:[#allocation2] sm:$0x3] %vm93, %v90
    // Predicated region
    $region22: #{tpu_custom_call.1} parent=1 // pred_check
      _
    $region23: #{tpu_custom_call.1} parent=1 // pred_check_branch
      %96 = sbr.rel (0) target = $region25
    $region24: #{tpu_custom_call.1} parent=1 // pred_region
      %98 = vsyncadd [#allocation3], 0
      %s100 = sshll.u32 [#allocation2], 4
      %s101 = int_to_ptr.vmem [resolvable:$true] %s100
      %s102 = sshll.u32 %s5, 4
      %s103 = int_to_ptr.hbm [resolvable:$true] %s102
      %105 = dma.vmem_to_hbm [thread:$0]  %s101, 32, %s103, [#allocation3]
    $region25: #{tpu_custom_call.1} parent=1 // pred_fallthru
      _
    // Predicated region
    $region26: #{tpu_custom_call.1} parent=1 // pred_check
      _
    $region27: #{tpu_custom_call.1} parent=1 // pred_check_branch
      %107 = sbr.rel (0) target = $region29
    $region28: #{tpu_custom_call.1} parent=1 // pred_region
      %109 = dma.done [#allocation3], 32
    $region29: #{tpu_custom_call.1} parent=1 // pred_fallthru
      _
    %110 = vsyncpa [#allocation3], 1

</llo_original>
